<compile_context>
chip_gen: v7x
topology: tpu7x:2x2x1
jax: 0.10.0
libtpu: 0.0.40
codegen_flags: <defaults>
</compile_context>

<pallas_src>
import functools

import jax
import jax.numpy as jnp
from jax import lax
from jax.experimental import pallas as pl
from jax.experimental.pallas import tpu as pltpu

_LANE = 128      # lane width (last dim)
_SUBLANE = 8     # f32 sublane width (second-to-last dim)


def _round_up(x, m):
    return ((x + m - 1) // m) * m


def _cdiv(a, b):
    return -(-a // b)


def _mapping_net_kernel(z_ref,
                        w1_ref, b1_ref,
                        w2_ref, b2_ref,
                        w3_ref, b3_ref,
                        w4_ref, b4_ref,
                        o_ref):
    z = z_ref[...]                                     # (TB, Cin_pad), f32

    # F.normalize(z, dim=1): z / max(||z||_2, 1e-12), as one EUP rsqrt.
    # max(sq, 1e-24) reproduces the eps clamp (zero rows stay zero).
    sq = jnp.sum(z * z, axis=1, keepdims=True)
    h = z * lax.rsqrt(jnp.maximum(sq, 1e-24))

    def linear_lrelu(x, w_ref, b_ref):
        # Matmul operands in the weights' storage dtype (bf16 default, MXU-
        # native on v5e/v6e/v7x); f32 accumulation on the MXU.  Bias add and
        # LeakyReLU stay f32 on the VPU.
        y = jnp.dot(x.astype(w_ref.dtype), w_ref[...],
                    preferred_element_type=jnp.float32)
        y = y + b_ref[...]                             # (1, out) broadcasts
        return jnp.maximum(y, 0.2 * y)                 # LeakyReLU(0.2), one vmax

    h = linear_lrelu(h, w1_ref, b1_ref)
    h = linear_lrelu(h, w2_ref, b2_ref)
    h = linear_lrelu(h, w3_ref, b3_ref)
    h = linear_lrelu(h, w4_ref, b4_ref)

    o_ref[...] = h.astype(o_ref.dtype)


def prepare_params(params, matmul_dtype=jnp.bfloat16):
    """Pad all feature dims to 128-lane multiples and cast weights ONCE.

    Call this once per parameter set (outside the per-step hot path) and pass
    the result to mapping_net_forward.  Zero padding is semantics-preserving:
    padded lanes stay zero through every bias + LeakyReLU and are sliced off
    at the end.
    """
    f32 = jnp.float32
    inp_ch, hid_ch = params["w1"].shape
    out_ch = params["w4"].shape[1]
    cin_p, hid_p, out_p = (_round_up(c, _LANE) for c in (inp_ch, hid_ch, out_ch))

    def pad2(a, rows, cols, dtype):
        a = jnp.asarray(a, f32)
        a = jnp.pad(a, ((0, rows - a.shape[0]), (0, cols - a.shape[1])))
        return a.astype(dtype)

    return dict(
        w1=pad2(params["w1"], cin_p, hid_p, matmul_dtype),
        b1=pad2(params["b1"], 1, hid_p, f32),
        w2=pad2(params["w2"], hid_p, hid_p, matmul_dtype),
        b2=pad2(params["b2"], 1, hid_p, f32),
        w3=pad2(params["w3"], hid_p, hid_p, matmul_dtype),
        b3=pad2(params["b3"], 1, hid_p, f32),
        w4=pad2(params["w4"], hid_p, out_p, matmul_dtype),
        b4=pad2(params["b4"], 1, out_p, f32),
    )


@functools.partial(jax.jit,
                   static_argnames=("out_ch", "block_b", "out_dtype"))
def mapping_net_forward(z, prepped, *, out_ch=None, block_b=512,
                        out_dtype=jnp.float32):
    """z: (B, inp_ch) float32.  prepped: output of prepare_params().

    out_ch:   true (un-padded) output width; defaults to the padded width.
    block_b:  max batch-tile rows (multiple of 8).
    out_dtype: jnp.float32 (exact) or jnp.bfloat16 (halves output writeback).
    """
    B, inp_ch = z.shape
    cin_p, hid_p = prepped["w1"].shape
    out_p = prepped["w4"].shape[1]
    if out_ch is None:
        out_ch = out_p

    # Lane-pad z only when needed -- the only per-call transform left.
    z = z.astype(jnp.float32)
    if inp_ch != cin_p:
        z = jnp.pad(z, ((0, 0), (0, cin_p - inp_ch)))

    # Batch tile: aim for >=2 grid steps at mid-size batches so the "parallel"
    # batch axis can shard across both v7x TensorCores; cap at block_b rows.
    # No batch padding -- the last block may be ragged (rows are independent;
    # OOB output writes are dropped).
    if B <= _SUBLANE:
        tb = B
    elif B <= 2 * block_b:
        tb = _round_up(_cdiv(B, 2), _SUBLANE)
    else:
        tb = block_b
    grid = (_cdiv(B, tb),)

    # Scoped-VMEM budget: single-buffered weights/biases + double-buffered
    # z/out tiles + f32 activation working set, with headroom.  Defaults are
    # only 16 MiB (v5e) / 32 MiB (v6e, v7x), far below physical.
    w_itemsize = prepped["w1"].dtype.itemsize
    weight_bytes = (cin_p * hid_p + 2 * hid_p * hid_p + hid_p * out_p) * w_itemsize
    weight_bytes += (3 * hid_p + out_p) * 4                       # biases (f32)
    io_bytes = 2 * tb * cin_p * 4 + 2 * tb * out_p * jnp.dtype(out_dtype).itemsize
    act_bytes = 3 * tb * max(cin_p, hid_p, out_p) * 4
    vmem_bytes = int(1.25 * (weight_bytes + io_bytes + act_bytes)) + (4 << 20)
    vmem_bytes = min(max(vmem_bytes, 32 << 20), 100 << 20)

    # Weights/biases: constant block index -> VMEM-resident across grid steps;
    # Buffered(1) drops the pointless second buffer (halves weight VMEM).
    def resident(shape):
        return pl.BlockSpec(shape, lambda i: (0, 0),
                            pipeline_mode=pl.Buffered(1))

    out = pl.pallas_call(
        _mapping_net_kernel,
        out_shape=jax.ShapeDtypeStruct((B, out_p), out_dtype),
        grid_spec=pltpu.PrefetchScalarGridSpec(
            num_scalar_prefetch=0,
            grid=grid,
            in_specs=[
                pl.BlockSpec((tb, cin_p), lambda i: (i, 0)),   # z tile streams
                resident((cin_p, hid_p)), resident((1, hid_p)),
                resident((hid_p, hid_p)), resident((1, hid_p)),
                resident((hid_p, hid_p)), resident((1, hid_p)),
                resident((hid_p, out_p)), resident((1, out_p)),
            ],
            out_specs=pl.BlockSpec((tb, out_p), lambda i: (i, 0)),
        ),
        compiler_params=pltpu.CompilerParams(
            dimension_semantics=("parallel",),
            vmem_limit_bytes=vmem_bytes),
    )(z, prepped["w1"], prepped["b1"], prepped["w2"], prepped["b2"],
      prepped["w3"], prepped["b3"], prepped["w4"], prepped["b4"])

    if out_ch != out_p:
        out = out[:, :out_ch]
    return out


def init_params(key, inp_ch, hid_ch, out_ch):
    """Deterministic synthetic params. Weights stored as (in, out) = W^T."""
    ks = jax.random.split(key, 8)

    def linear(kw, kb, fan_in, fan_out):
        # torch default init: U(-1/sqrt(in), 1/sqrt(in))
        bound = 1.0 / jnp.sqrt(fan_in)
        w = jax.random.uniform(kw, (fan_in, fan_out), jnp.float32, -bound, bound)
        b = jax.random.uniform(kb, (1, fan_out), jnp.float32, -bound, bound)
        return w, b

    w1, b1 = linear(ks[0], ks[1], inp_ch, hid_ch)
    w2, b2 = linear(ks[2], ks[3], hid_ch, hid_ch)
    w3, b3 = linear(ks[4], ks[5], hid_ch, hid_ch)
    w4, b4 = linear(ks[6], ks[7], hid_ch, out_ch)
    return dict(w1=w1, b1=b1, w2=w2, b2=b2, w3=w3, b3=b3, w4=w4, b4=b4)


def _reference_forward(z, p):
    """Pure-JAX reference matching the PyTorch module (f32)."""
    norm = jnp.sqrt(jnp.sum(z * z, axis=1, keepdims=True))
    h = z / jnp.maximum(norm, 1e-12)
    for wk, bk in (("w1", "b1"), ("w2", "b2"), ("w3", "b3"), ("w4", "b4")):
        h = h @ p[wk] + p[bk]
        h = jnp.where(h >= 0.0, h, 0.2 * h)
    return h


if __name__ == "__main__":
    inp_ch, hid_ch, out_ch = 16, 32, 32
    batch = 8

    key = jax.random.PRNGKey(0)
    kz, kp = jax.random.split(key)
    z = jax.random.normal(kz, (batch, inp_ch), dtype=jnp.float32)
    params = init_params(kp, inp_ch, hid_ch, out_ch)

    ref = _reference_forward(z, params)

    # Default path: bf16 matmul operands (MXU-native on v5e/v6e/v7x), f32
    # accumulation -> ~1e-2-level deviation from the f32 reference expected.
    prepped = prepare_params(params)                      # pad + cast ONCE
    out_bf16 = jax.block_until_ready(
        mapping_net_forward(z, prepped, out_ch=out_ch))
    assert out_bf16.shape == (batch, out_ch)
    assert jnp.allclose(out_bf16, ref, atol=5e-2, rtol=5e-2)

    # Exact f32-operand path for a tight numerical check.
    prepped_f32 = prepare_params(params, matmul_dtype=jnp.float32)
    out_f32 = jax.block_until_ready(
        mapping_net_forward(z, prepped_f32, out_ch=out_ch))
    assert out_f32.shape == (batch, out_ch)
    assert jnp.allclose(out_f32, ref, atol=1e-5, rtol=1e-5)

    print("KERNEL_OK")
</pallas_src>

<mosaic_0001>
module attributes {stable_mosaic.version = 11 : i64} {
  func.func @_mapping_net_kernel(%arg0: i32, %arg1: memref<8x128xf32, #tpu.memory_space<vmem>>, %arg2: memref<128x128xbf16, #tpu.memory_space<vmem>>, %arg3: memref<1x128xf32, #tpu.memory_space<vmem>>, %arg4: memref<128x128xbf16, #tpu.memory_space<vmem>>, %arg5: memref<1x128xf32, #tpu.memory_space<vmem>>, %arg6: memref<128x128xbf16, #tpu.memory_space<vmem>>, %arg7: memref<1x128xf32, #tpu.memory_space<vmem>>, %arg8: memref<128x128xbf16, #tpu.memory_space<vmem>>, %arg9: memref<1x128xf32, #tpu.memory_space<vmem>>, %arg10: memref<8x128xf32, #tpu.memory_space<vmem>>) attributes {dimension_semantics = [#tpu.dimension_semantics<parallel>], iteration_bounds = array<i64: 1>, scalar_prefetch = 0 : i64, scratch_operands = 0 : i64, tpu.core_type = #tpu.core_type<tc>, window_params = [{transform_indices = @transform_0, window_bounds = array<i64: 8, 128>}, {pipeline_mode = #tpu.pipeline_mode<synchronous>, transform_indices = @transform_1, window_bounds = array<i64: 128, 128>}, {pipeline_mode = #tpu.pipeline_mode<synchronous>, transform_indices = @transform_2, window_bounds = array<i64: 1, 128>}, {pipeline_mode = #tpu.pipeline_mode<synchronous>, transform_indices = @transform_3, window_bounds = array<i64: 128, 128>}, {pipeline_mode = #tpu.pipeline_mode<synchronous>, transform_indices = @transform_4, window_bounds = array<i64: 1, 128>}, {pipeline_mode = #tpu.pipeline_mode<synchronous>, transform_indices = @transform_5, window_bounds = array<i64: 128, 128>}, {pipeline_mode = #tpu.pipeline_mode<synchronous>, transform_indices = @transform_6, window_bounds = array<i64: 1, 128>}, {pipeline_mode = #tpu.pipeline_mode<synchronous>, transform_indices = @transform_7, window_bounds = array<i64: 128, 128>}, {pipeline_mode = #tpu.pipeline_mode<synchronous>, transform_indices = @transform_8, window_bounds = array<i64: 1, 128>}, {transform_indices = @transform_9, window_bounds = array<i64: 8, 128>}]} {
    %c0 = arith.constant 0 : index
    %c0_0 = arith.constant 0 : index
    %0 = vector.load %arg1[%c0, %c0_0] : memref<8x128xf32, #tpu.memory_space<vmem>>, vector<8x128xf32>
    %1 = arith.mulf %0, %0 : vector<8x128xf32>
    %cst = arith.constant dense<0.000000e+00> : vector<8xf32>
    %2 = vector.multi_reduction <add>, %1, %cst [1] : vector<8x128xf32> to vector<8xf32>
    %3 = vector.shape_cast %2 : vector<8xf32> to vector<8x1xf32>
    %cst_1 = arith.constant 1.000000e-24 : f32
    %4 = vector.broadcast %cst_1 : f32 to vector<8x1xf32>
    %5 = arith.maximumf %3, %4 : vector<8x1xf32>
    %6 = math.rsqrt %5 : vector<8x1xf32>
    %7 = vector.broadcast %6 : vector<8x1xf32> to vector<8x128xf32>
    %8 = arith.mulf %0, %7 : vector<8x128xf32>
    %9 = arith.truncf %8 : vector<8x128xf32> to vector<8x128xbf16>
    %c0_2 = arith.constant 0 : index
    %c0_3 = arith.constant 0 : index
    %10 = vector.load %arg2[%c0_2, %c0_3] : memref<128x128xbf16, #tpu.memory_space<vmem>>, vector<128x128xbf16>
    %cst_4 = arith.constant dense<0.000000e+00> : vector<8x128xf32>
    %11 = tpu.matmul %9, %10, %cst_4 {dimension_numbers = #tpu.dot_dimension_numbers<[1], [0], [0], [1], [0, 0, 1, 1], [], []>} : vector<8x128xbf16>, vector<128x128xbf16>, vector<8x128xf32> -> vector<8x128xf32>
    %c0_5 = arith.constant 0 : index
    %c0_6 = arith.constant 0 : index
    %12 = vector.load %arg3[%c0_5, %c0_6] : memref<1x128xf32, #tpu.memory_space<vmem>>, vector<1x128xf32>
    %13 = vector.broadcast %12 : vector<1x128xf32> to vector<8x128xf32>
    %14 = arith.addf %11, %13 : vector<8x128xf32>
    %cst_7 = arith.constant 2.000000e-01 : f32
    %15 = vector.broadcast %cst_7 : f32 to vector<8x128xf32>
    %16 = arith.mulf %15, %14 : vector<8x128xf32>
    %17 = arith.maximumf %14, %16 : vector<8x128xf32>
    %18 = arith.truncf %17 : vector<8x128xf32> to vector<8x128xbf16>
    %c0_8 = arith.constant 0 : index
    %c0_9 = arith.constant 0 : index
    %19 = vector.load %arg4[%c0_8, %c0_9] : memref<128x128xbf16, #tpu.memory_space<vmem>>, vector<128x128xbf16>
    %cst_10 = arith.constant dense<0.000000e+00> : vector<8x128xf32>
    %20 = tpu.matmul %18, %19, %cst_10 {dimension_numbers = #tpu.dot_dimension_numbers<[1], [0], [0], [1], [0, 0, 1, 1], [], []>} : vector<8x128xbf16>, vector<128x128xbf16>, vector<8x128xf32> -> vector<8x128xf32>
    %c0_11 = arith.constant 0 : index
    %c0_12 = arith.constant 0 : index
    %21 = vector.load %arg5[%c0_11, %c0_12] : memref<1x128xf32, #tpu.memory_space<vmem>>, vector<1x128xf32>
    %22 = vector.broadcast %21 : vector<1x128xf32> to vector<8x128xf32>
    %23 = arith.addf %20, %22 : vector<8x128xf32>
    %cst_13 = arith.constant 2.000000e-01 : f32
    %24 = vector.broadcast %cst_13 : f32 to vector<8x128xf32>
    %25 = arith.mulf %24, %23 : vector<8x128xf32>
    %26 = arith.maximumf %23, %25 : vector<8x128xf32>
    %27 = arith.truncf %26 : vector<8x128xf32> to vector<8x128xbf16>
    %c0_14 = arith.constant 0 : index
    %c0_15 = arith.constant 0 : index
    %28 = vector.load %arg6[%c0_14, %c0_15] : memref<128x128xbf16, #tpu.memory_space<vmem>>, vector<128x128xbf16>
    %cst_16 = arith.constant dense<0.000000e+00> : vector<8x128xf32>
    %29 = tpu.matmul %27, %28, %cst_16 {dimension_numbers = #tpu.dot_dimension_numbers<[1], [0], [0], [1], [0, 0, 1, 1], [], []>} : vector<8x128xbf16>, vector<128x128xbf16>, vector<8x128xf32> -> vector<8x128xf32>
    %c0_17 = arith.constant 0 : index
    %c0_18 = arith.constant 0 : index
    %30 = vector.load %arg7[%c0_17, %c0_18] : memref<1x128xf32, #tpu.memory_space<vmem>>, vector<1x128xf32>
    %31 = vector.broadcast %30 : vector<1x128xf32> to vector<8x128xf32>
    %32 = arith.addf %29, %31 : vector<8x128xf32>
    %cst_19 = arith.constant 2.000000e-01 : f32
    %33 = vector.broadcast %cst_19 : f32 to vector<8x128xf32>
    %34 = arith.mulf %33, %32 : vector<8x128xf32>
    %35 = arith.maximumf %32, %34 : vector<8x128xf32>
    %36 = arith.truncf %35 : vector<8x128xf32> to vector<8x128xbf16>
    %c0_20 = arith.constant 0 : index
    %c0_21 = arith.constant 0 : index
    %37 = vector.load %arg8[%c0_20, %c0_21] : memref<128x128xbf16, #tpu.memory_space<vmem>>, vector<128x128xbf16>
    %cst_22 = arith.constant dense<0.000000e+00> : vector<8x128xf32>
    %38 = tpu.matmul %36, %37, %cst_22 {dimension_numbers = #tpu.dot_dimension_numbers<[1], [0], [0], [1], [0, 0, 1, 1], [], []>} : vector<8x128xbf16>, vector<128x128xbf16>, vector<8x128xf32> -> vector<8x128xf32>
    %c0_23 = arith.constant 0 : index
    %c0_24 = arith.constant 0 : index
    %39 = vector.load %arg9[%c0_23, %c0_24] : memref<1x128xf32, #tpu.memory_space<vmem>>, vector<1x128xf32>
    %40 = vector.broadcast %39 : vector<1x128xf32> to vector<8x128xf32>
    %41 = arith.addf %38, %40 : vector<8x128xf32>
    %cst_25 = arith.constant 2.000000e-01 : f32
    %42 = vector.broadcast %cst_25 : f32 to vector<8x128xf32>
    %43 = arith.mulf %42, %41 : vector<8x128xf32>
    %44 = arith.maximumf %41, %43 : vector<8x128xf32>
    %c0_26 = arith.constant 0 : index
    %c0_27 = arith.constant 0 : index
    %45 = vector.load %arg10[%c0_26, %c0_27] : memref<8x128xf32, #tpu.memory_space<vmem>>, vector<8x128xf32>
    tpu.vector_store %arg10[%c0_26, %c0_27], %44 {strides = array<i32>} : memref<8x128xf32, #tpu.memory_space<vmem>>, vector<8x128xf32>,
    return
  }
  func.func @transform_0(%arg0: i32) -> (i32, i32) {
    %c0_i32 = arith.constant 0 : i32
    %c0_i32_0 = arith.constant 0 : i32
    return %arg0, %c0_i32 : i32, i32
  }
  func.func @transform_1(%arg0: i32) -> (i32, i32) {
    %c0_i32 = arith.constant 0 : i32
    %c0_i32_0 = arith.constant 0 : i32
    %c0_i32_1 = arith.constant 0 : i32
    return %c0_i32, %c0_i32_0 : i32, i32
  }
  func.func @transform_2(%arg0: i32) -> (i32, i32) {
    %c0_i32 = arith.constant 0 : i32
    %c0_i32_0 = arith.constant 0 : i32
    %c0_i32_1 = arith.constant 0 : i32
    return %c0_i32, %c0_i32_0 : i32, i32
  }
  func.func @transform_3(%arg0: i32) -> (i32, i32) {
    %c0_i32 = arith.constant 0 : i32
    %c0_i32_0 = arith.constant 0 : i32
    %c0_i32_1 = arith.constant 0 : i32
    return %c0_i32, %c0_i32_0 : i32, i32
  }
  func.func @transform_4(%arg0: i32) -> (i32, i32) {
    %c0_i32 = arith.constant 0 : i32
    %c0_i32_0 = arith.constant 0 : i32
    %c0_i32_1 = arith.constant 0 : i32
    return %c0_i32, %c0_i32_0 : i32, i32
  }
  func.func @transform_5(%arg0: i32) -> (i32, i32) {
    %c0_i32 = arith.constant 0 : i32
    %c0_i32_0 = arith.constant 0 : i32
    %c0_i32_1 = arith.constant 0 : i32
    return %c0_i32, %c0_i32_0 : i32, i32
  }
  func.func @transform_6(%arg0: i32) -> (i32, i32) {
    %c0_i32 = arith.constant 0 : i32
    %c0_i32_0 = arith.constant 0 : i32
    %c0_i32_1 = arith.constant 0 : i32
    return %c0_i32, %c0_i32_0 : i32, i32
  }
  func.func @transform_7(%arg0: i32) -> (i32, i32) {
    %c0_i32 = arith.constant 0 : i32
    %c0_i32_0 = arith.constant 0 : i32
    %c0_i32_1 = arith.constant 0 : i32
    return %c0_i32, %c0_i32_0 : i32, i32
  }
  func.func @transform_8(%arg0: i32) -> (i32, i32) {
    %c0_i32 = arith.constant 0 : i32
    %c0_i32_0 = arith.constant 0 : i32
    %c0_i32_1 = arith.constant 0 : i32
    return %c0_i32, %c0_i32_0 : i32, i32
  }
  func.func @transform_9(%arg0: i32) -> (i32, i32) {
    %c0_i32 = arith.constant 0 : i32
    %c0_i32_0 = arith.constant 0 : i32
    return %arg0, %c0_i32 : i32, i32
  }
}

</mosaic_0001>

<llo_original>
// kernel: mapping_net_forward.1
$region0: #{mapping_net_forward.1}
  #allocation0 [shape = 'u32[]', space=smem, size = 0x4, offset = 0x4, fixed_abs, tag = 'smem constant byte address 0x4 - core index']
  #allocation1 [shape = 'u32[144,128]{1,0:T(1,128)}', space=vmem, size = 0x12000, scoped, tag = 'internal scratch']
  %s0 = inlined_call_operand.vmem [shape: f32[8,128], index: 0, kind: input, shape index: {}]
  %s1 = inlined_call_operand.hbm [shape: bf16[128,128], index: 1, kind: input, shape index: {}]
  %s2 = inlined_call_operand.vmem [shape: f32[1,128], index: 2, kind: input, shape index: {}]
  %s3 = inlined_call_operand.hbm [shape: bf16[128,128], index: 3, kind: input, shape index: {}]
  %s4 = inlined_call_operand.vmem [shape: f32[1,128], index: 4, kind: input, shape index: {}]
  %s5 = inlined_call_operand.hbm [shape: bf16[128,128], index: 5, kind: input, shape index: {}]
  %s6 = inlined_call_operand.vmem [shape: f32[1,128], index: 6, kind: input, shape index: {}]
  %s7 = inlined_call_operand.hbm [shape: bf16[128,128], index: 7, kind: input, shape index: {}]
  %s8 = inlined_call_operand.vmem [shape: f32[1,128], index: 8, kind: input, shape index: {}]
  %s9 = inlined_call_operand.hbm [shape: f32[8,128], index: 9, kind: output, shape index: {}]
  %s10 = sld [smem:[#allocation0]]
  $region62: #{mapping_net_forward.1} parent=0
    _
  %s12 = ssub.s32 1, %s10
  %s13 = scalar_select 0, %s12, %s10
  $region1: #{mapping_net_forward.1} parent=0
    #allocation2 [shape = 'u8[32768]{0}', space=vmem, size = 0x8000, scoped, tag = 'input window, operand 1, single buffered']
    #allocation3 [shape = 's32[1]{0}', space=sflag, size = 0x4, scoped, tag = 'scoped memory for mapping_net_forward.1']
    #allocation4 [shape = 's32[1]{0}', space=sflag, size = 0x4, scoped, tag = 'scoped memory for mapping_net_forward.1']
    #allocation5 [shape = 'u8[32768]{0}', space=vmem, size = 0x8000, scoped, tag = 'input window, operand 3, single buffered']
    #allocation6 [shape = 's32[1]{0}', space=sflag, size = 0x4, scoped, tag = 'scoped memory for mapping_net_forward.1']
    #allocation7 [shape = 'u8[32768]{0}', space=vmem, size = 0x8000, scoped, tag = 'input window, operand 5, single buffered']
    #allocation8 [shape = 'u8[32768]{0}', space=vmem, size = 0x8000, scoped, tag = 'input window, operand 7, single buffered']
    #allocation9 [shape = 's32[1]{0}', space=sflag, size = 0x4, scoped, tag = 'scoped memory for mapping_net_forward.1']
    #allocation10 [shape = 'u8[4096]{0}', space=vmem, size = 0x1000, scoped, tag = 'output window, operand 0, single buffered']
    %14 = vsyncpa [#allocation3], 0
    %15 = vsyncpa [#allocation6], 0
    %16 = vsyncpa [#allocation9], 0
    %17 = vsyncpa [#allocation4], 0
    // Predicated region
    $region2: #{mapping_net_forward.1} parent=1 // pred_check
      _
    $region3: #{mapping_net_forward.1} parent=1 // pred_check_branch
      %19 = sbr.rel (0) target = $region5
    $region4: #{mapping_net_forward.1} parent=1 // pred_region
      _
    $region5: #{mapping_net_forward.1} parent=1 // pred_fallthru
      _
    // Predicated region
    $region6: #{mapping_net_forward.1} parent=1 // pred_check
      _
    $region7: #{mapping_net_forward.1} parent=1 // pred_check_branch
      %21 = sbr.rel (0) target = $region9
    $region8: #{mapping_net_forward.1} parent=1 // pred_region
      %s23 = ssub.s32 1024, 1024
      %24 = vsyncadd [#allocation3], %s23
      %s25 = sshll.u32 [#allocation2], 4
      %s26 = int_to_ptr.vmem [resolvable:$true] %s25
      %31 = dma.hbm_to_vmem [thread:$0]  %s1, 1024, %s26, [#allocation3], 64, 64, 4
    $region9: #{mapping_net_forward.1} parent=1 // pred_fallthru
      _
    // Predicated region
    $region10: #{mapping_net_forward.1} parent=1 // pred_check
      _
    $region11: #{mapping_net_forward.1} parent=1 // pred_check_branch
      %33 = sbr.rel (0) target = $region13
    $region12: #{mapping_net_forward.1} parent=1 // pred_region
      _
    $region13: #{mapping_net_forward.1} parent=1 // pred_fallthru
      _
    // Predicated region
    $region14: #{mapping_net_forward.1} parent=1 // pred_check
      _
    $region15: #{mapping_net_forward.1} parent=1 // pred_check_branch
      %35 = sbr.rel (0) target = $region17
    $region16: #{mapping_net_forward.1} parent=1 // pred_region
      %s37 = ssub.s32 1024, 1024
      %38 = vsyncadd [#allocation6], %s37
      %s39 = sshll.u32 [#allocation5], 4
      %s40 = int_to_ptr.vmem [resolvable:$true] %s39
      %45 = dma.hbm_to_vmem [thread:$0]  %s3, 1024, %s40, [#allocation6], 64, 64, 4
    $region17: #{mapping_net_forward.1} parent=1 // pred_fallthru
      _
    // Predicated region
    $region18: #{mapping_net_forward.1} parent=1 // pred_check
      _
    $region19: #{mapping_net_forward.1} parent=1 // pred_check_branch
      %47 = sbr.rel (0) target = $region21
    $region20: #{mapping_net_forward.1} parent=1 // pred_region
      _
    $region21: #{mapping_net_forward.1} parent=1 // pred_fallthru
      _
    // Predicated region
    $region22: #{mapping_net_forward.1} parent=1 // pred_check
      _
    $region23: #{mapping_net_forward.1} parent=1 // pred_check_branch
      %49 = sbr.rel (0) target = $region25
    $region24: #{mapping_net_forward.1} parent=1 // pred_region
      %s51 = ssub.s32 1024, 1024
      %52 = vsyncadd [#allocation6], %s51
      %s53 = sshll.u32 [#allocation7], 4
      %s54 = int_to_ptr.vmem [resolvable:$true] %s53
      %59 = dma.hbm_to_vmem [thread:$0]  %s5, 1024, %s54, [#allocation6], 64, 64, 4
    $region25: #{mapping_net_forward.1} parent=1 // pred_fallthru
      _
    // Predicated region
    $region26: #{mapping_net_forward.1} parent=1 // pred_check
      _
    $region27: #{mapping_net_forward.1} parent=1 // pred_check_branch
      %61 = sbr.rel (0) target = $region29
    $region28: #{mapping_net_forward.1} parent=1 // pred_region
      _
    $region29: #{mapping_net_forward.1} parent=1 // pred_fallthru
      _
    // Predicated region
    $region30: #{mapping_net_forward.1} parent=1 // pred_check
      _
    $region31: #{mapping_net_forward.1} parent=1 // pred_check_branch
      %63 = sbr.rel (0) target = $region33
    $region32: #{mapping_net_forward.1} parent=1 // pred_region
      %s65 = ssub.s32 1024, 1024
      %66 = vsyncadd [#allocation9], %s65
      %s67 = sshll.u32 [#allocation8], 4
      %s68 = int_to_ptr.vmem [resolvable:$true] %s67
      %73 = dma.hbm_to_vmem [thread:$0]  %s7, 1024, %s68, [#allocation9], 64, 64, 4
    $region33: #{mapping_net_forward.1} parent=1 // pred_fallthru
      _
    // Predicated region
    $region34: #{mapping_net_forward.1} parent=1 // pred_check
      _
    $region35: #{mapping_net_forward.1} parent=1 // pred_check_branch
      %75 = sbr.rel (0) target = $region37
    $region36: #{mapping_net_forward.1} parent=1 // pred_region
      _
    $region37: #{mapping_net_forward.1} parent=1 // pred_fallthru
      _
    // Predicated region
    $region38: #{mapping_net_forward.1} parent=1 // pred_check
      _
    $region39: #{mapping_net_forward.1} parent=1 // pred_check_branch
      %77 = sbr.rel (0) target = $region41
    $region40: #{mapping_net_forward.1} parent=1 // pred_region
      %78 = dma.done [#allocation3], 1024
    $region41: #{mapping_net_forward.1} parent=1 // pred_fallthru
      _
    // Predicated region
    $region42: #{mapping_net_forward.1} parent=1 // pred_check
      _
    $region43: #{mapping_net_forward.1} parent=1 // pred_check_branch
      %80 = sbr.rel (0) target = $region45
    $region44: #{mapping_net_forward.1} parent=1 // pred_region
      %81 = dma.done [#allocation6], 1024
    $region45: #{mapping_net_forward.1} parent=1 // pred_fallthru
      _
    // Predicated region
    $region46: #{mapping_net_forward.1} parent=1 // pred_check
      _
    $region47: #{mapping_net_forward.1} parent=1 // pred_check_branch
      %83 = sbr.rel (0) target = $region49
    $region48: #{mapping_net_forward.1} parent=1 // pred_region
      %84 = dma.done [#allocation6], 1024
    $region49: #{mapping_net_forward.1} parent=1 // pred_fallthru
      _
    // Predicated region
    $region50: #{mapping_net_forward.1} parent=1 // pred_check
      _
    $region51: #{mapping_net_forward.1} parent=1 // pred_check_branch
      %86 = sbr.rel (0) target = $region53
    $region52: #{mapping_net_forward.1} parent=1 // pred_region
      %87 = dma.done [#allocation9], 1024
    $region53: #{mapping_net_forward.1} parent=1 // pred_fallthru
      _
    %v89 = vld [vmem:[%s0] sm:$0xff]
    %v90 = vmul.f32 %v89, %v89
    %91 = vadd.xlane.f32.xlu0 %v90
    %v92 = vpop.xlane.xlu0 %91
    %v93 = vmax.f32 %v92, 1e-24
    %v94 = vrsqrt.pop %v93
    %v95 = vmul.f32 %v89, %v94
    %v96 = vpack.c.bf16 %v95, %v95
    %v97 = vld [vmem:[#allocation2] sm:$0xf]
    %v98 = vld [vmem:[#allocation2 + $0x4] sm:$0xf]
    %v99 = vld [vmem:[#allocation2 + $0x8] sm:$0xf]
    %v100 = vld [vmem:[#allocation2 + $0xc] sm:$0xf]
    %v101 = vld [vmem:[#allocation2 + $0x10] sm:$0xf]
    %v102 = vld [vmem:[#allocation2 + $0x14] sm:$0xf]
    %v103 = vld [vmem:[#allocation2 + $0x18] sm:$0xf]
    %v104 = vld [vmem:[#allocation2 + $0x1c] sm:$0xf]
    %v105 = vld [vmem:[#allocation2 + $0x20] sm:$0xf]
    %v106 = vld [vmem:[#allocation2 + $0x24] sm:$0xf]
    %v107 = vld [vmem:[#allocation2 + $0x28] sm:$0xf]
    %v108 = vld [vmem:[#allocation2 + $0x2c] sm:$0xf]
    %v109 = vld [vmem:[#allocation2 + $0x30] sm:$0xf]
    %v110 = vld [vmem:[#allocation2 + $0x34] sm:$0xf]
    %v111 = vld [vmem:[#allocation2 + $0x38] sm:$0xf]
    %v112 = vld [vmem:[#allocation2 + $0x3c] sm:$0xf]
    %v113 = vld [vmem:[%s2] sm:$0x1]
    %v115 = vlaneseq
    %v116 = vshrl.u32 %v115, 7
    %v117 = vsub.s32 0, %v116
    %v118 = vrot.slane %v113, %v117
    %v136 = vunpack.c.l.b16 %v97
    %v137 = vunpack.c.l.b16 %v98
    %v138 = vunpack.c.l.b16 %v99
    %v139 = vunpack.c.l.b16 %v100
    %v140 = vunpack.c.l.b16 %v101
    %v141 = vunpack.c.l.b16 %v102
    %v142 = vunpack.c.l.b16 %v103
    %v143 = vunpack.c.l.b16 %v104
    %v144 = vunpack.c.l.b16 %v105
    %v145 = vunpack.c.l.b16 %v106
    %v146 = vunpack.c.l.b16 %v107
    %v147 = vunpack.c.l.b16 %v108
    %v148 = vunpack.c.l.b16 %v109
    %v149 = vunpack.c.l.b16 %v110
    %v150 = vunpack.c.l.b16 %v111
    %v151 = vunpack.c.l.b16 %v112
    %v152 = vpack.c.b16 %v137, %v136
    %v153 = vpack.c.b16 %v139, %v138
    %v154 = vpack.c.b16 %v141, %v140
    %v155 = vpack.c.b16 %v143, %v142
    %v156 = vpack.c.b16 %v145, %v144
    %v157 = vpack.c.b16 %v147, %v146
    %v158 = vpack.c.b16 %v149, %v148
    %v159 = vpack.c.b16 %v151, %v150
    %168 = vmatprep.subr.bf16.mxu0 0
    %169 = vmatpush1.bf16.msra.mxu0 %v152
    %170 = vmatprep.subr.bf16.mxu0 0
    %171 = vmatpush1.bf16.msra.mxu0 %v153
    %172 = vmatprep.subr.bf16.mxu0 0
    %173 = vmatpush1.bf16.msra.mxu0 %v154
    %174 = vmatprep.subr.bf16.mxu0 0
    %175 = vmatpush1.bf16.msra.mxu0 %v155
    %176 = vmatprep.subr.bf16.mxu0 0
    %177 = vmatpush1.bf16.msra.mxu0 %v156
    %178 = vmatprep.subr.bf16.mxu0 0
    %179 = vmatpush1.bf16.msra.mxu0 %v157
    %180 = vmatprep.subr.bf16.mxu0 0
    %181 = vmatpush1.bf16.msra.mxu0 %v158
    %182 = vmatprep.subr.bf16.mxu0 0
    %183 = vmatpush1.bf16.msra.mxu0 %v159
    %184 = vmatprep.subr.bf16.mxu0 0
    %185 = vmatpush1.bf16.msra.mxu0 0
    %186 = vmatprep.subr.bf16.mxu0 0
    %187 = vmatpush1.bf16.msra.mxu0 0
    %188 = vmatprep.subr.bf16.mxu0 0
    %189 = vmatpush1.bf16.msra.mxu0 0
    %190 = vmatprep.subr.bf16.mxu0 0
    %191 = vmatpush1.bf16.msra.mxu0 0
    %192 = vmatprep.subr.bf16.mxu0 0
    %193 = vmatpush1.bf16.msra.mxu0 0
    %194 = vmatprep.subr.bf16.mxu0 0
    %195 = vmatpush1.bf16.msra.mxu0 0
    %196 = vmatprep.subr.bf16.mxu0 0
    %197 = vmatpush1.bf16.msra.mxu0 0
    %198 = vmatprep.subr.bf16.mxu0 0
    %199 = vmatpush1.bf16.msra.mxu0 0
    %200 = vmatprep.mubr.bf16.mxu0 0
    %201 = vmatmul.mubr.bf16.gmra.mrb[0].mxu0 %v96
    %v202 = vpop.f32.mrb[0].mxu0
    %v203 = vadd.f32 %v118, %v202
    %v204 = vpop.f32.mrb[0].mxu0
    %v205 = vpop.f32.mrb[0].mxu0
    %v206 = vpop.f32.mrb[0].mxu0
    %207 = vdwg.mxu0
    %v208 = vmul.f32 %v203, 0.2
    %v209 = vmax.f32 %v203, %v208
    %v210 = vpack.c.bf16 %v209, %v209
    %v211 = vld [vmem:[#allocation5] sm:$0xf]
    %v212 = vld [vmem:[#allocation5 + $0x4] sm:$0xf]
    %v213 = vld [vmem:[#allocation5 + $0x8] sm:$0xf]
    %v214 = vld [vmem:[#allocation5 + $0xc] sm:$0xf]
    %v215 = vld [vmem:[#allocation5 + $0x10] sm:$0xf]
    %v216 = vld [vmem:[#allocation5 + $0x14] sm:$0xf]
    %v217 = vld [vmem:[#allocation5 + $0x18] sm:$0xf]
    %v218 = vld [vmem:[#allocation5 + $0x1c] sm:$0xf]
    %v219 = vld [vmem:[#allocation5 + $0x20] sm:$0xf]
    %v220 = vld [vmem:[#allocation5 + $0x24] sm:$0xf]
    %v221 = vld [vmem:[#allocation5 + $0x28] sm:$0xf]
    %v222 = vld [vmem:[#allocation5 + $0x2c] sm:$0xf]
    %v223 = vld [vmem:[#allocation5 + $0x30] sm:$0xf]
    %v224 = vld [vmem:[#allocation5 + $0x34] sm:$0xf]
    %v225 = vld [vmem:[#allocation5 + $0x38] sm:$0xf]
    %v226 = vld [vmem:[#allocation5 + $0x3c] sm:$0xf]
    %v227 = vld [vmem:[%s4] sm:$0x1]
    %v229 = vlaneseq
    %v230 = vshrl.u32 %v229, 7
    %v231 = vsub.s32 0, %v230
    %v232 = vrot.slane %v227, %v231
    %v250 = vunpack.c.l.b16 %v211
    %v251 = vunpack.c.l.b16 %v212
    %v252 = vunpack.c.l.b16 %v213
    %v253 = vunpack.c.l.b16 %v214
    %v254 = vunpack.c.l.b16 %v215
    %v255 = vunpack.c.l.b16 %v216
    %v256 = vunpack.c.l.b16 %v217
    %v257 = vunpack.c.l.b16 %v218
    %v258 = vunpack.c.l.b16 %v219
    %v259 = vunpack.c.l.b16 %v220
    %v260 = vunpack.c.l.b16 %v221
    %v261 = vunpack.c.l.b16 %v222
    %v262 = vunpack.c.l.b16 %v223
    %v263 = vunpack.c.l.b16 %v224
    %v264 = vunpack.c.l.b16 %v225
    %v265 = vunpack.c.l.b16 %v226
    %v266 = vpack.c.b16 %v251, %v250
    %v267 = vpack.c.b16 %v253, %v252
    %v268 = vpack.c.b16 %v255, %v254
    %v269 = vpack.c.b16 %v257, %v256
    %v270 = vpack.c.b16 %v259, %v258
    %v271 = vpack.c.b16 %v261, %v260
    %v272 = vpack.c.b16 %v263, %v262
    %v273 = vpack.c.b16 %v265, %v264
    %282 = vmatprep.subr.bf16.mxu0 0
    %283 = vmatpush1.bf16.msra.mxu0 %v266
    %284 = vmatprep.subr.bf16.mxu0 0
    %285 = vmatpush1.bf16.msra.mxu0 %v267
    %286 = vmatprep.subr.bf16.mxu0 0
    %287 = vmatpush1.bf16.msra.mxu0 %v268
    %288 = vmatprep.subr.bf16.mxu0 0
    %289 = vmatpush1.bf16.msra.mxu0 %v269
    %290 = vmatprep.subr.bf16.mxu0 0
    %291 = vmatpush1.bf16.msra.mxu0 %v270
    %292 = vmatprep.subr.bf16.mxu0 0
    %293 = vmatpush1.bf16.msra.mxu0 %v271
    %294 = vmatprep.subr.bf16.mxu0 0
    %295 = vmatpush1.bf16.msra.mxu0 %v272
    %296 = vmatprep.subr.bf16.mxu0 0
    %297 = vmatpush1.bf16.msra.mxu0 %v273
    %298 = vmatprep.subr.bf16.mxu0 0
    %299 = vmatpush1.bf16.msra.mxu0 0
    %300 = vmatprep.subr.bf16.mxu0 0
    %301 = vmatpush1.bf16.msra.mxu0 0
    %302 = vmatprep.subr.bf16.mxu0 0
    %303 = vmatpush1.bf16.msra.mxu0 0
    %304 = vmatprep.subr.bf16.mxu0 0
    %305 = vmatpush1.bf16.msra.mxu0 0
    %306 = vmatprep.subr.bf16.mxu0 0
    %307 = vmatpush1.bf16.msra.mxu0 0
    %308 = vmatprep.subr.bf16.mxu0 0
    %309 = vmatpush1.bf16.msra.mxu0 0
    %310 = vmatprep.subr.bf16.mxu0 0
    %311 = vmatpush1.bf16.msra.mxu0 0
    %312 = vmatprep.subr.bf16.mxu0 0
    %313 = vmatpush1.bf16.msra.mxu0 0
    %314 = vmatprep.mubr.bf16.mxu0 0
    %315 = vmatmul.mubr.bf16.gmra.mrb[0].mxu0 %v210
    %v316 = vpop.f32.mrb[0].mxu0
    %v317 = vadd.f32 %v232, %v316
    %v318 = vpop.f32.mrb[0].mxu0
    %v319 = vpop.f32.mrb[0].mxu0
    %v320 = vpop.f32.mrb[0].mxu0
    %321 = vdwg.mxu0
    %v322 = vmul.f32 %v317, 0.2
    %v323 = vmax.f32 %v317, %v322
    %v324 = vpack.c.bf16 %v323, %v323
    %v325 = vld [vmem:[#allocation7] sm:$0xf]
    %v326 = vld [vmem:[#allocation7 + $0x4] sm:$0xf]
    %v327 = vld [vmem:[#allocation7 + $0x8] sm:$0xf]
    %v328 = vld [vmem:[#allocation7 + $0xc] sm:$0xf]
    %v329 = vld [vmem:[#allocation7 + $0x10] sm:$0xf]
    %v330 = vld [vmem:[#allocation7 + $0x14] sm:$0xf]
    %v331 = vld [vmem:[#allocation7 + $0x18] sm:$0xf]
    %v332 = vld [vmem:[#allocation7 + $0x1c] sm:$0xf]
    %v333 = vld [vmem:[#allocation7 + $0x20] sm:$0xf]
    %v334 = vld [vmem:[#allocation7 + $0x24] sm:$0xf]
    %v335 = vld [vmem:[#allocation7 + $0x28] sm:$0xf]
    %v336 = vld [vmem:[#allocation7 + $0x2c] sm:$0xf]
    %v337 = vld [vmem:[#allocation7 + $0x30] sm:$0xf]
    %v338 = vld [vmem:[#allocation7 + $0x34] sm:$0xf]
    %v339 = vld [vmem:[#allocation7 + $0x38] sm:$0xf]
    %v340 = vld [vmem:[#allocation7 + $0x3c] sm:$0xf]
    %v341 = vld [vmem:[%s6] sm:$0x1]
    %v343 = vlaneseq
    %v344 = vshrl.u32 %v343, 7
    %v345 = vsub.s32 0, %v344
    %v346 = vrot.slane %v341, %v345
    %v364 = vunpack.c.l.b16 %v325
    %v365 = vunpack.c.l.b16 %v326
    %v366 = vunpack.c.l.b16 %v327
    %v367 = vunpack.c.l.b16 %v328
    %v368 = vunpack.c.l.b16 %v329
    %v369 = vunpack.c.l.b16 %v330
    %v370 = vunpack.c.l.b16 %v331
    %v371 = vunpack.c.l.b16 %v332
    %v372 = vunpack.c.l.b16 %v333
    %v373 = vunpack.c.l.b16 %v334
    %v374 = vunpack.c.l.b16 %v335
    %v375 = vunpack.c.l.b16 %v336
    %v376 = vunpack.c.l.b16 %v337
    %v377 = vunpack.c.l.b16 %v338
    %v378 = vunpack.c.l.b16 %v339
    %v379 = vunpack.c.l.b16 %v340
    %v380 = vpack.c.b16 %v365, %v364
    %v381 = vpack.c.b16 %v367, %v366
    %v382 = vpack.c.b16 %v369, %v368
    %v383 = vpack.c.b16 %v371, %v370
    %v384 = vpack.c.b16 %v373, %v372
    %v385 = vpack.c.b16 %v375, %v374
    %v386 = vpack.c.b16 %v377, %v376
    %v387 = vpack.c.b16 %v379, %v378
    %396 = vmatprep.subr.bf16.mxu0 0
    %397 = vmatpush1.bf16.msra.mxu0 %v380
    %398 = vmatprep.subr.bf16.mxu0 0
    %399 = vmatpush1.bf16.msra.mxu0 %v381
    %400 = vmatprep.subr.bf16.mxu0 0
    %401 = vmatpush1.bf16.msra.mxu0 %v382
    %402 = vmatprep.subr.bf16.mxu0 0
    %403 = vmatpush1.bf16.msra.mxu0 %v383
    %404 = vmatprep.subr.bf16.mxu0 0
    %405 = vmatpush1.bf16.msra.mxu0 %v384
    %406 = vmatprep.subr.bf16.mxu0 0
    %407 = vmatpush1.bf16.msra.mxu0 %v385
    %408 = vmatprep.subr.bf16.mxu0 0
    %409 = vmatpush1.bf16.msra.mxu0 %v386
    %410 = vmatprep.subr.bf16.mxu0 0
    %411 = vmatpush1.bf16.msra.mxu0 %v387
    %412 = vmatprep.subr.bf16.mxu0 0
    %413 = vmatpush1.bf16.msra.mxu0 0
    %414 = vmatprep.subr.bf16.mxu0 0
    %415 = vmatpush1.bf16.msra.mxu0 0
    %416 = vmatprep.subr.bf16.mxu0 0
    %417 = vmatpush1.bf16.msra.mxu0 0
    %418 = vmatprep.subr.bf16.mxu0 0
    %419 = vmatpush1.bf16.msra.mxu0 0
    %420 = vmatprep.subr.bf16.mxu0 0
    %421 = vmatpush1.bf16.msra.mxu0 0
    %422 = vmatprep.subr.bf16.mxu0 0
    %423 = vmatpush1.bf16.msra.mxu0 0
    %424 = vmatprep.subr.bf16.mxu0 0
    %425 = vmatpush1.bf16.msra.mxu0 0
    %426 = vmatprep.subr.bf16.mxu0 0
    %427 = vmatpush1.bf16.msra.mxu0 0
    %428 = vmatprep.mubr.bf16.mxu0 0
    %429 = vmatmul.mubr.bf16.gmra.mrb[0].mxu0 %v324
    %v430 = vpop.f32.mrb[0].mxu0
    %v431 = vadd.f32 %v346, %v430
    %v432 = vpop.f32.mrb[0].mxu0
    %v433 = vpop.f32.mrb[0].mxu0
    %v434 = vpop.f32.mrb[0].mxu0
    %435 = vdwg.mxu0
    %v436 = vmul.f32 %v431, 0.2
    %v437 = vmax.f32 %v431, %v436
    %v438 = vpack.c.bf16 %v437, %v437
    %v439 = vld [vmem:[#allocation8] sm:$0xf]
    %v440 = vld [vmem:[#allocation8 + $0x4] sm:$0xf]
    %v441 = vld [vmem:[#allocation8 + $0x8] sm:$0xf]
    %v442 = vld [vmem:[#allocation8 + $0xc] sm:$0xf]
    %v443 = vld [vmem:[#allocation8 + $0x10] sm:$0xf]
    %v444 = vld [vmem:[#allocation8 + $0x14] sm:$0xf]
    %v445 = vld [vmem:[#allocation8 + $0x18] sm:$0xf]
    %v446 = vld [vmem:[#allocation8 + $0x1c] sm:$0xf]
    %v447 = vld [vmem:[#allocation8 + $0x20] sm:$0xf]
    %v448 = vld [vmem:[#allocation8 + $0x24] sm:$0xf]
    %v449 = vld [vmem:[#allocation8 + $0x28] sm:$0xf]
    %v450 = vld [vmem:[#allocation8 + $0x2c] sm:$0xf]
    %v451 = vld [vmem:[#allocation8 + $0x30] sm:$0xf]
    %v452 = vld [vmem:[#allocation8 + $0x34] sm:$0xf]
    %v453 = vld [vmem:[#allocation8 + $0x38] sm:$0xf]
    %v454 = vld [vmem:[#allocation8 + $0x3c] sm:$0xf]
    %v455 = vld [vmem:[%s8] sm:$0x1]
    %v457 = vlaneseq
    %v458 = vshrl.u32 %v457, 7
    %v459 = vsub.s32 0, %v458
    %v460 = vrot.slane %v455, %v459
    %v478 = vunpack.c.l.b16 %v439
    %v479 = vunpack.c.l.b16 %v440
    %v480 = vunpack.c.l.b16 %v441
    %v481 = vunpack.c.l.b16 %v442
    %v482 = vunpack.c.l.b16 %v443
    %v483 = vunpack.c.l.b16 %v444
    %v484 = vunpack.c.l.b16 %v445
    %v485 = vunpack.c.l.b16 %v446
    %v486 = vunpack.c.l.b16 %v447
    %v487 = vunpack.c.l.b16 %v448
    %v488 = vunpack.c.l.b16 %v449
    %v489 = vunpack.c.l.b16 %v450
    %v490 = vunpack.c.l.b16 %v451
    %v491 = vunpack.c.l.b16 %v452
    %v492 = vunpack.c.l.b16 %v453
    %v493 = vunpack.c.l.b16 %v454
    %v494 = vpack.c.b16 %v479, %v478
    %v495 = vpack.c.b16 %v481, %v480
    %v496 = vpack.c.b16 %v483, %v482
    %v497 = vpack.c.b16 %v485, %v484
    %v498 = vpack.c.b16 %v487, %v486
    %v499 = vpack.c.b16 %v489, %v488
    %v500 = vpack.c.b16 %v491, %v490
    %v501 = vpack.c.b16 %v493, %v492
    %510 = vmatprep.subr.bf16.mxu0 0
    %511 = vmatpush1.bf16.msra.mxu0 %v494
    %512 = vmatprep.subr.bf16.mxu0 0
    %513 = vmatpush1.bf16.msra.mxu0 %v495
    %514 = vmatprep.subr.bf16.mxu0 0
    %515 = vmatpush1.bf16.msra.mxu0 %v496
    %516 = vmatprep.subr.bf16.mxu0 0
    %517 = vmatpush1.bf16.msra.mxu0 %v497
    %518 = vmatprep.subr.bf16.mxu0 0
    %519 = vmatpush1.bf16.msra.mxu0 %v498
    %520 = vmatprep.subr.bf16.mxu0 0
    %521 = vmatpush1.bf16.msra.mxu0 %v499
    %522 = vmatprep.subr.bf16.mxu0 0
    %523 = vmatpush1.bf16.msra.mxu0 %v500
    %524 = vmatprep.subr.bf16.mxu0 0
    %525 = vmatpush1.bf16.msra.mxu0 %v501
    %526 = vmatprep.subr.bf16.mxu0 0
    %527 = vmatpush1.bf16.msra.mxu0 0
    %528 = vmatprep.subr.bf16.mxu0 0
    %529 = vmatpush1.bf16.msra.mxu0 0
    %530 = vmatprep.subr.bf16.mxu0 0
    %531 = vmatpush1.bf16.msra.mxu0 0
    %532 = vmatprep.subr.bf16.mxu0 0
    %533 = vmatpush1.bf16.msra.mxu0 0
    %534 = vmatprep.subr.bf16.mxu0 0
    %535 = vmatpush1.bf16.msra.mxu0 0
    %536 = vmatprep.subr.bf16.mxu0 0
    %537 = vmatpush1.bf16.msra.mxu0 0
    %538 = vmatprep.subr.bf16.mxu0 0
    %539 = vmatpush1.bf16.msra.mxu0 0
    %540 = vmatprep.subr.bf16.mxu0 0
    %541 = vmatpush1.bf16.msra.mxu0 0
    %542 = vmatprep.mubr.bf16.mxu0 0
    %543 = vmatmul.mubr.bf16.gmra.mrb[0].mxu0 %v438
    %v544 = vpop.f32.mrb[0].mxu0
    %v545 = vadd.f32 %v460, %v544
    %v546 = vpop.f32.mrb[0].mxu0
    %v547 = vpop.f32.mrb[0].mxu0
    %v548 = vpop.f32.mrb[0].mxu0
    %549 = vdwg.mxu0
    %v550 = vmul.f32 %v545, 0.2
    %v551 = vmax.f32 %v545, %v550
    %552 = vst [vmem:[#allocation10] sm:$0xff] %v551
    // Predicated region
    $region54: #{mapping_net_forward.1} parent=1 // pred_check
      _
    $region55: #{mapping_net_forward.1} parent=1 // pred_check_branch
      %554 = sbr.rel (0) target = $region57
    $region56: #{mapping_net_forward.1} parent=1 // pred_region
      %s556 = ssub.s32 128, 128
      %557 = vsyncadd [#allocation4], %s556
      %s559 = sshll.u32 [#allocation10], 4
      %s560 = int_to_ptr.vmem [resolvable:$true] %s559
      %562 = dma.vmem_to_hbm [thread:$0]  %s560, 128, %s9, [#allocation4]
    $region57: #{mapping_net_forward.1} parent=1 // pred_fallthru
      _
    // Predicated region
    $region58: #{mapping_net_forward.1} parent=1 // pred_check
      _
    $region59: #{mapping_net_forward.1} parent=1 // pred_check_branch
      %564 = sbr.rel (0) target = $region61
    $region60: #{mapping_net_forward.1} parent=1 // pred_region
      %565 = dma.done [#allocation4], 128
    $region61: #{mapping_net_forward.1} parent=1 // pred_fallthru
      _
    %566 = vsyncpa [#allocation3], 1
    %567 = vsyncpa [#allocation6], 1
    %568 = vsyncpa [#allocation9], 1
    %569 = vsyncpa [#allocation4], 1

</llo_original>
